<compile_context>
chip_gen: v7x
topology: tpu7x:2x2x1
jax: 0.10.0
libtpu: 0.0.40
codegen_flags: <defaults>
</compile_context>

<pallas_src>
import functools

import jax
import jax.numpy as jnp
from jax.experimental import pallas as pl
from jax.experimental.pallas import tpu as pltpu


def _round_up(a, b):
    return (a + b - 1) // b * b


def _basic_block_kernel(x_ref, w_ref, shift_ref, o_ref, *,
                        k, wp, pad, halo, residual):
    """One 128-aligned lane tile of the batch-folded padded-flat image per step.

    x_ref     : (Cin, L_in)        bf16  zero-padded activation, batch folded on
                                         lanes (resident across all grid steps)
    w_ref     : (K, Cout, K*Cin)   bf16  conv weight with BN scale folded in;
                                         rows within a kh slab ordered (kw, cin)
    shift_ref : (Cout, 1)          f32   folded BN shift
    o_ref     : (Cout, L_t)        f32   conv + BN (+ residual) for this tile
    """
    cout, l_t = o_ref.shape

    # 128-aligned base of this lane tile (l_t is a multiple of 128).
    base = pl.multiple_of(pl.program_id(0) * l_t, 128)

    # One aligned dynamic load of tile + halo; every tap window below is a
    # static slice of this value (no unaligned dynamic ref slicing).
    xt = x_ref[:, pl.ds(base, l_t + halo)]                  # (Cin, l_t + halo)

    acc = jnp.zeros((cout, l_t), jnp.float32)
    center = None
    for kh in range(k):
        # One big (unaligned) lane shift per kh, then cheap 0..k-1 kw sub-shifts.
        slab = xt[:, kh * wp: kh * wp + l_t + k - 1]        # (Cin, l_t + k - 1)
        taps = [slab[:, kw: kw + l_t] for kw in range(k)]   # k x (Cin, l_t)
        if residual and kh == pad:
            center = taps[pad]                              # == original x (bf16)
        rhs = jnp.concatenate(taps, axis=0)                 # (k*Cin, l_t)
        # Accumulating per-kh dot: never materializes the (K*K*Cin, L) RHS.
        acc = acc + jnp.dot(w_ref[kh], rhs,
                            preferred_element_type=jnp.float32)

    y = acc + shift_ref[...]                                # folded BN shift
    if residual:
        y = y + center.astype(jnp.float32)
    o_ref[...] = y.astype(o_ref.dtype)


def basic_block_forward(x_nchw, w_oihw, gamma, beta, running_mean, running_var,
                        eps=1e-5, lane_tile=2048):
    """BasicBlock forward: conv(k, pad=k//2, no bias) -> BN(eval) [-> +x]."""
    N, Cin, H, W = x_nchw.shape
    Cout, Cin2, K, K2 = w_oihw.shape
    assert Cin2 == Cin and K2 == K and K % 2 == 1
    assert lane_tile % 128 == 0
    pad = K // 2
    residual = (Cin == Cout)

    Hp, Wp = H + 2 * pad, W + 2 * pad
    d_max = (K - 1) * Wp + (K - 1)              # largest tap offset
    halo = _round_up(d_max, 128)                # 128-aligned per-tile halo

    # Batch folded onto the lane axis; lane tiling of the combined work axis.
    L_work = N * Hp * Wp
    L_t = min(lane_tile, _round_up(L_work, 128))
    grid_t = pl.cdiv(L_work, L_t)
    L_out = grid_t * L_t                        # lane-dense output width
    L_in = L_out + halo                         # resident activation width

    # ---- JAX glue (single bf16 fusion): cast -> transpose -> pad -> flatten ----
    xb = x_nchw.astype(jnp.bfloat16)
    xb = jnp.transpose(xb, (1, 0, 2, 3))                        # (Cin, N, H, W)
    xb = jnp.pad(xb, ((0, 0), (0, 0), (pad, pad), (pad, pad)))  # halo pad
    xb = xb.reshape(Cin, L_work)
    xb = jnp.pad(xb, ((0, 0), (0, L_in - L_work)))              # tile/halo tail

    # Fold eval-mode BN into per-channel scale/shift; fold the scale into the
    # (tiny) conv weights so only the shift remains in the kernel.
    inv_std = 1.0 / jnp.sqrt(running_var.astype(jnp.float32) + eps)
    scale = gamma.astype(jnp.float32) * inv_std                 # (Cout,)
    shift = beta.astype(jnp.float32) - running_mean.astype(jnp.float32) * scale
    # OIHW -> (K, Cout, K*Cin); within each kh slab rows are ordered (kw, cin).
    w3 = jnp.transpose(w_oihw.astype(jnp.float32), (2, 0, 3, 1))  # (K,Cout,K,Cin)
    w3 = w3.reshape(K, Cout, K * Cin) * scale[None, :, None]
    w3 = w3.astype(jnp.bfloat16)
    shift2 = shift.reshape(Cout, 1)

    kernel = functools.partial(_basic_block_kernel, k=K, wp=Wp, pad=pad,
                               halo=halo, residual=residual)

    flops = int(2 * Cout * K * K * Cin * L_out)
    bytes_accessed = int(Cin * L_in * 2 + Cout * L_out * 4
                         + K * Cout * K * Cin * 2 + Cout * 4)

    # VMEM: resident activation + double-buffered f32 out tiles + tap slabs + acc.
    vmem_est = (Cin * L_in * 2 + 2 * Cout * L_t * 4
                + (2 * K * Cin + Cout) * (L_t + halo) * 4 + (1 << 20))
    # Cap at 64 MiB so the limit stays within physical VMEM on v7x as well
    # (raise toward ~96 MiB on v6e when using very large lane tiles).
    vmem_limit = int(min(64 * 1024 * 1024, max(32 * 1024 * 1024, 2 * vmem_est)))

    out_work = pl.pallas_call(
        kernel,
        out_shape=jax.ShapeDtypeStruct((Cout, L_out), jnp.float32),
        grid=(grid_t,),
        in_specs=[
            pl.BlockSpec((Cin, L_in), lambda t: (0, 0)),          # resident input
            pl.BlockSpec((K, Cout, K * Cin), lambda t: (0, 0, 0)),
            pl.BlockSpec((Cout, 1), lambda t: (0, 0)),
        ],
        out_specs=pl.BlockSpec((Cout, L_t), lambda t: (0, t)),
        compiler_params=pltpu.CompilerParams(
            dimension_semantics=("parallel",),
            vmem_limit_bytes=vmem_limit),
        cost_estimate=pl.CostEstimate(flops=flops, transcendentals=0,
                                      bytes_accessed=bytes_accessed),
    )(xb, w3, shift2)

    # De-pad + unfold the batch (single slice+transpose fusion, no extra math).
    out = out_work[:, :L_work].reshape(Cout, N, Hp, Wp)[:, :, :H, :W]
    return jnp.transpose(out, (1, 0, 2, 3))                       # NCHW f32


def _reference_forward(x, w, gamma, beta, mean, var, eps=1e-5):
    """Pure-JAX f32 reference (same eval-mode semantics) for verification."""
    y = jax.lax.conv_general_dilated(
        x, w, window_strides=(1, 1), padding="SAME",
        dimension_numbers=("NCHW", "OIHW", "NCHW"))
    g = gamma.reshape(1, -1, 1, 1)
    b = beta.reshape(1, -1, 1, 1)
    m = mean.reshape(1, -1, 1, 1)
    v = var.reshape(1, -1, 1, 1)
    y = (y - m) / jnp.sqrt(v + eps) * g + b
    return y + x  # residual (Cin == Cout)


if __name__ == "__main__":
    # Small shapes consistent with the module: BasicBlock(conv, 4, 4, 3, bn=True)
    N, C, H, W, K = 2, 4, 16, 16, 3

    key = jax.random.PRNGKey(0)
    kx, kw, kg, kb, km, kv = jax.random.split(key, 6)

    x = jax.random.normal(kx, (N, C, H, W), dtype=jnp.float32)
    weight = 0.1 * jax.random.normal(kw, (C, C, K, K), dtype=jnp.float32)   # OIHW
    gamma = 1.0 + 0.1 * jax.random.normal(kg, (C,), dtype=jnp.float32)
    beta = 0.1 * jax.random.normal(kb, (C,), dtype=jnp.float32)
    running_mean = 0.05 * jax.random.normal(km, (C,), dtype=jnp.float32)
    running_var = jax.random.uniform(kv, (C,), minval=0.5, maxval=1.5,
                                     dtype=jnp.float32)

    # Small lane tile so the multi-tile halo path is exercised at this tiny shape
    # (production: leave the default / set 4-16k lanes per chip generation).
    out = basic_block_forward(x, weight, gamma, beta, running_mean, running_var,
                              lane_tile=512)
    out = jax.block_until_ready(out)

    ref = _reference_forward(x, weight, gamma, beta, running_mean, running_var)
    ref = jax.block_until_ready(ref)

    assert out.shape == (N, C, H, W)
    # Tolerance reflects bf16 MXU operands (f32 accumulation); reference is f32.
    if not bool(jnp.allclose(out, ref, atol=5e-2, rtol=5e-2)):
        raise AssertionError("Pallas kernel result does not match reference")

    print("KERNEL_OK")
</pallas_src>

<mosaic_0001>
module attributes {stable_mosaic.version = 11 : i64} {
  func.func @_basic_block_kernel(%arg0: i32, %arg1: memref<4x1152xbf16, #tpu.memory_space<vmem>>, %arg2: memref<3x4x12xbf16, #tpu.memory_space<vmem>>, %arg3: memref<4x1xf32, #tpu.memory_space<vmem>>, %arg4: memref<4x512xf32, #tpu.memory_space<vmem>>) attributes {dimension_semantics = [#tpu.dimension_semantics<parallel>], iteration_bounds = array<i64: 2>, scalar_prefetch = 0 : i64, scratch_operands = 0 : i64, tpu.core_type = #tpu.core_type<tc>, window_params = [{pipeline_mode = #tpu.pipeline_mode<synchronous>, transform_indices = @transform_0, window_bounds = array<i64: 4, 1152>}, {pipeline_mode = #tpu.pipeline_mode<synchronous>, transform_indices = @transform_1, window_bounds = array<i64: 3, 4, 12>}, {pipeline_mode = #tpu.pipeline_mode<synchronous>, transform_indices = @transform_2, window_bounds = array<i64: 4, 1>}, {transform_indices = @transform_3, window_bounds = array<i64: 4, 512>}]} {
    %c512_i32 = arith.constant 512 : i32
    %0 = arith.muli %arg0, %c512_i32 : i32
    %1 = tpu.assume_multiple %0, 128 : i32
    %c0 = arith.constant 0 : index
    %2 = arith.index_cast %1 : i32 to index
    %3 = vector.load %arg1[%c0, %2] : memref<4x1152xbf16, #tpu.memory_space<vmem>>, vector<4x640xbf16>
    %cst = arith.constant 0.000000e+00 : f32
    %4 = vector.broadcast %cst : f32 to vector<4x512xf32>
    %5 = vector.extract_strided_slice %3 {offsets = [0, 0], sizes = [4, 514], strides = [1, 1]} : vector<4x640xbf16> to vector<4x514xbf16>
    %6 = vector.extract_strided_slice %5 {offsets = [0, 0], sizes = [4, 512], strides = [1, 1]} : vector<4x514xbf16> to vector<4x512xbf16>
    %7 = vector.extract_strided_slice %5 {offsets = [0, 1], sizes = [4, 512], strides = [1, 1]} : vector<4x514xbf16> to vector<4x512xbf16>
    %8 = vector.extract_strided_slice %5 {offsets = [0, 2], sizes = [4, 512], strides = [1, 1]} : vector<4x514xbf16> to vector<4x512xbf16>
    %9 = tpu.concatenate %6, %7, %8 in 0 : vector<4x512xbf16>, vector<4x512xbf16>, vector<4x512xbf16> -> vector<12x512xbf16>
    %c0_0 = arith.constant 0 : index
    %c0_1 = arith.constant 0 : index
    %c0_2 = arith.constant 0 : index
    %10 = vector.load %arg2[%c0_0, %c0_1, %c0_2] : memref<3x4x12xbf16, #tpu.memory_space<vmem>>, vector<1x4x12xbf16>
    %11 = vector.shape_cast %10 : vector<1x4x12xbf16> to vector<4x12xbf16>
    %cst_3 = arith.constant dense<0.000000e+00> : vector<4x512xf32>
    %12 = tpu.matmul %11, %9, %cst_3 {dimension_numbers = #tpu.dot_dimension_numbers<[1], [0], [0], [1], [0, 0, 1, 1], [], []>} : vector<4x12xbf16>, vector<12x512xbf16>, vector<4x512xf32> -> vector<4x512xf32>
    %13 = arith.addf %4, %12 : vector<4x512xf32>
    %14 = vector.extract_strided_slice %3 {offsets = [0, 18], sizes = [4, 514], strides = [1, 1]} : vector<4x640xbf16> to vector<4x514xbf16>
    %15 = vector.extract_strided_slice %14 {offsets = [0, 0], sizes = [4, 512], strides = [1, 1]} : vector<4x514xbf16> to vector<4x512xbf16>
    %16 = vector.extract_strided_slice %14 {offsets = [0, 1], sizes = [4, 512], strides = [1, 1]} : vector<4x514xbf16> to vector<4x512xbf16>
    %17 = vector.extract_strided_slice %14 {offsets = [0, 2], sizes = [4, 512], strides = [1, 1]} : vector<4x514xbf16> to vector<4x512xbf16>
    %18 = tpu.concatenate %15, %16, %17 in 0 : vector<4x512xbf16>, vector<4x512xbf16>, vector<4x512xbf16> -> vector<12x512xbf16>
    %c1 = arith.constant 1 : index
    %c0_4 = arith.constant 0 : index
    %c0_5 = arith.constant 0 : index
    %19 = vector.load %arg2[%c1, %c0_4, %c0_5] : memref<3x4x12xbf16, #tpu.memory_space<vmem>>, vector<1x4x12xbf16>
    %20 = vector.shape_cast %19 : vector<1x4x12xbf16> to vector<4x12xbf16>
    %cst_6 = arith.constant dense<0.000000e+00> : vector<4x512xf32>
    %21 = tpu.matmul %20, %18, %cst_6 {dimension_numbers = #tpu.dot_dimension_numbers<[1], [0], [0], [1], [0, 0, 1, 1], [], []>} : vector<4x12xbf16>, vector<12x512xbf16>, vector<4x512xf32> -> vector<4x512xf32>
    %22 = arith.addf %13, %21 : vector<4x512xf32>
    %23 = vector.extract_strided_slice %3 {offsets = [0, 36], sizes = [4, 514], strides = [1, 1]} : vector<4x640xbf16> to vector<4x514xbf16>
    %24 = vector.extract_strided_slice %23 {offsets = [0, 0], sizes = [4, 512], strides = [1, 1]} : vector<4x514xbf16> to vector<4x512xbf16>
    %25 = vector.extract_strided_slice %23 {offsets = [0, 1], sizes = [4, 512], strides = [1, 1]} : vector<4x514xbf16> to vector<4x512xbf16>
    %26 = vector.extract_strided_slice %23 {offsets = [0, 2], sizes = [4, 512], strides = [1, 1]} : vector<4x514xbf16> to vector<4x512xbf16>
    %27 = tpu.concatenate %24, %25, %26 in 0 : vector<4x512xbf16>, vector<4x512xbf16>, vector<4x512xbf16> -> vector<12x512xbf16>
    %c2 = arith.constant 2 : index
    %c0_7 = arith.constant 0 : index
    %c0_8 = arith.constant 0 : index
    %28 = vector.load %arg2[%c2, %c0_7, %c0_8] : memref<3x4x12xbf16, #tpu.memory_space<vmem>>, vector<1x4x12xbf16>
    %29 = vector.shape_cast %28 : vector<1x4x12xbf16> to vector<4x12xbf16>
    %cst_9 = arith.constant dense<0.000000e+00> : vector<4x512xf32>
    %30 = tpu.matmul %29, %27, %cst_9 {dimension_numbers = #tpu.dot_dimension_numbers<[1], [0], [0], [1], [0, 0, 1, 1], [], []>} : vector<4x12xbf16>, vector<12x512xbf16>, vector<4x512xf32> -> vector<4x512xf32>
    %31 = arith.addf %22, %30 : vector<4x512xf32>
    %c0_10 = arith.constant 0 : index
    %c0_11 = arith.constant 0 : index
    %32 = vector.load %arg3[%c0_10, %c0_11] : memref<4x1xf32, #tpu.memory_space<vmem>>, vector<4x1xf32>
    %33 = vector.broadcast %32 : vector<4x1xf32> to vector<4x512xf32>
    %34 = arith.addf %31, %33 : vector<4x512xf32>
    %35 = arith.extf %16 : vector<4x512xbf16> to vector<4x512xf32>
    %36 = arith.addf %34, %35 : vector<4x512xf32>
    %c0_12 = arith.constant 0 : index
    %c0_13 = arith.constant 0 : index
    %37 = vector.load %arg4[%c0_12, %c0_13] : memref<4x512xf32, #tpu.memory_space<vmem>>, vector<4x512xf32>
    tpu.vector_store %arg4[%c0_12, %c0_13], %36 {strides = array<i32>} : memref<4x512xf32, #tpu.memory_space<vmem>>, vector<4x512xf32>,
    return
  }
  func.func @transform_0(%arg0: i32) -> (i32, i32) {
    %c0_i32 = arith.constant 0 : i32
    %c0_i32_0 = arith.constant 0 : i32
    %c0_i32_1 = arith.constant 0 : i32
    return %c0_i32, %c0_i32_0 : i32, i32
  }
  func.func @transform_1(%arg0: i32) -> (i32, i32, i32) {
    %c0_i32 = arith.constant 0 : i32
    %c0_i32_0 = arith.constant 0 : i32
    %c0_i32_1 = arith.constant 0 : i32
    %c0_i32_2 = arith.constant 0 : i32
    return %c0_i32, %c0_i32_0, %c0_i32_1 : i32, i32, i32
  }
  func.func @transform_2(%arg0: i32) -> (i32, i32) {
    %c0_i32 = arith.constant 0 : i32
    %c0_i32_0 = arith.constant 0 : i32
    %c0_i32_1 = arith.constant 0 : i32
    return %c0_i32, %c0_i32_0 : i32, i32
  }
  func.func @transform_3(%arg0: i32) -> (i32, i32) {
    %c0_i32 = arith.constant 0 : i32
    %c0_i32_0 = arith.constant 0 : i32
    return %c0_i32, %arg0 : i32, i32
  }
}

</mosaic_0001>

<llo_original>
// kernel: tpu_custom_call.1
$region0: #{tpu_custom_call.1}
  #allocation0 [shape = 'u32[]', space=smem, size = 0x4, offset = 0x4, fixed_abs, tag = 'smem constant byte address 0x4 - core index']
  #allocation1 [shape = 'u32[144,128]{1,0:T(1,128)}', space=vmem, size = 0x12000, scoped, tag = 'internal scratch']
  %s0 = inlined_call_operand.hbm [shape: bf16[4,1152], index: 0, kind: input, shape index: {}]
  %s1 = inlined_call_operand.vmem [shape: bf16[3,4,12], index: 1, kind: input, shape index: {}]
  %s2 = inlined_call_operand.vmem [shape: f32[4,1], index: 2, kind: input, shape index: {}]
  %s3 = inlined_call_operand.hbm [shape: f32[4,1024], index: 3, kind: output, shape index: {}]
  %s4 = sld [smem:[#allocation0]]
  $region49: #{tpu_custom_call.1} parent=0
    _
  %s6 = ssub.s32 1, %s4
  %s7 = scalar_select 0, %s6, %s4
  $region1: #{tpu_custom_call.1} parent=0
    #allocation2 [shape = 'u8[9216]{0}', space=vmem, size = 0x2400, scoped, tag = 'input window, operand 0, single buffered']
    #allocation3 [shape = 's32[2]{0}', space=sflag, size = 0x8, scoped, tag = 'scoped memory for tpu_custom_call.1']
    #allocation4 [shape = 's32[2]{0}', space=sflag, size = 0x8, scoped, tag = 'scoped memory for tpu_custom_call.1']
    #allocation5 [shape = 'u8[16384]{0}', space=vmem, size = 0x4000, scoped, tag = 'output window, operand 0']
    %8 = vsyncpa [#allocation3], 0
    %9 = vsyncpa [#allocation4], 0
    %s10 = scalar_lea.sflag [#allocation4], 1
    %11 = vsyncpa %s10, 0
    loop: start=0, step=1, limit=4
    $region2: #{tpu_custom_call.1} parent=1 // loop_pre_header
      _
    $region3: #{tpu_custom_call.1} parent=1 // loop_header
      %s13 = sphi 0, %s17
      %p14 = scmp.ge.s32.totalorder %s13, 4
      %s21 = sphi 0, %s21
      %s23 = sphi 0, %s21
      %s24 = sphi 0, %s23
      %s38 = sphi 0, %s24
      %s42 = sphi 0, %s42
      %s44 = sphi 0, %s42
      %s45 = sphi 0, %s44
      %s59 = sphi 0, %s45
      %s63 = sphi 0, %s63
      %s65 = sphi 0, %s63
      %s66 = sphi 0, %s65
      %s80 = sphi 0, %s66
      %s86 = sphi 0, %s88
      %s89 = sphi 0, %s86
      %s90 = sphi 0, %s89
      %s106 = sphi 0, %s90
    $region4: #{tpu_custom_call.1} parent=1 // loop_header_branch
      %16 = sbr.rel (%p14) target = $region8
    $region5: #{tpu_custom_call.1} parent=1 // loop_body
      %s18 = ssub.s32 %s13, 1
      %s19 = ssub.s32 %s13, 2
      %s20 = sadd.s32 %s13, 1
      %s22 = sadd.s32 %s21, 1
      %p25 = scmp.eq.s32.totalorder %s13, 1
      %p26 = scmp.ne.s32.totalorder %s21, %s23
      %p27 = scmp.eq.s32.totalorder %s13, 0
      %p28 = por %p26, %p27
      %p29 = scmp.ne.s32.totalorder %s21, %s23
      %p30 = scmp.eq.s32.totalorder %s18, 1
      %p31 = por %p29, %p30
      %p32 = scmp.ne.s32.totalorder %s23, %s24
      %p33 = scmp.eq.s32.totalorder %s18, 0
      %p34 = por %p32, %p33
      %p35 = scmp.ne.s32.totalorder %s23, %s24
      %p36 = scmp.eq.s32.totalorder %s19, 1
      %p37 = por %p35, %p36
      %p39 = scmp.ne.s32.totalorder %s24, %s38
      %p40 = scmp.eq.s32.totalorder %s19, 0
      %p41 = por %p39, %p40
      %s43 = sadd.s32 %s42, 1
      %p46 = scmp.eq.s32.totalorder %s13, 1
      %p47 = scmp.ne.s32.totalorder %s42, %s44
      %p48 = scmp.eq.s32.totalorder %s13, 0
      %p49 = por %p47, %p48
      %p50 = scmp.ne.s32.totalorder %s42, %s44
      %p51 = scmp.eq.s32.totalorder %s18, 1
      %p52 = por %p50, %p51
      %p53 = scmp.ne.s32.totalorder %s44, %s45
      %p54 = scmp.eq.s32.totalorder %s18, 0
      %p55 = por %p53, %p54
      %p56 = scmp.ne.s32.totalorder %s44, %s45
      %p57 = scmp.eq.s32.totalorder %s19, 1
      %p58 = por %p56, %p57
      %p60 = scmp.ne.s32.totalorder %s45, %s59
      %p61 = scmp.eq.s32.totalorder %s19, 0
      %p62 = por %p60, %p61
      %s64 = sadd.s32 %s63, 1
      %p67 = scmp.eq.s32.totalorder %s13, 1
      %p68 = scmp.ne.s32.totalorder %s63, %s65
      %p69 = scmp.eq.s32.totalorder %s13, 0
      %p70 = por %p68, %p69
      %p71 = scmp.ne.s32.totalorder %s63, %s65
      %p72 = scmp.eq.s32.totalorder %s18, 1
      %p73 = por %p71, %p72
      %p74 = scmp.ne.s32.totalorder %s65, %s66
      %p75 = scmp.eq.s32.totalorder %s18, 0
      %p76 = por %p74, %p75
      %p77 = scmp.ne.s32.totalorder %s65, %s66
      %p78 = scmp.eq.s32.totalorder %s19, 1
      %p79 = por %p77, %p78
      %p81 = scmp.ne.s32.totalorder %s66, %s80
      %p82 = scmp.eq.s32.totalorder %s19, 0
      %p83 = por %p81, %p82
      %s84 = ssub.s32 %s13, %s20
      %p85 = scmp.eq.s32.totalorder %s84, 0
      %s87 = sadd.s32 %s86, 1
      %s88 = scalar_select %p85, %s86, %s87
      %p91 = pneg %p85
      %p92 = scmp.eq.s32.totalorder %s13, 1
      %p93 = por %p91, %p92
      %p94 = scmp.ne.s32.totalorder %s86, %s89
      %p95 = scmp.eq.s32.totalorder %s13, 0
      %p96 = por %p94, %p95
      %p97 = scmp.ne.s32.totalorder %s86, %s89
      %p98 = scmp.eq.s32.totalorder %s18, 1
      %p99 = por %p97, %p98
      %p100 = scmp.ne.s32.totalorder %s89, %s90
      %p101 = scmp.eq.s32.totalorder %s18, 0
      %p102 = por %p100, %p101
      %p103 = scmp.ne.s32.totalorder %s89, %s90
      %p104 = scmp.eq.s32.totalorder %s19, 1
      %p105 = por %p103, %p104
      %p107 = scmp.ne.s32.totalorder %s90, %s106
      %p108 = scmp.eq.s32.totalorder %s19, 0
      %p109 = por %p107, %p108
      %p110 = scmp.le.s32.totalorder 1, %s13
      %p111 = scmp.lt.s32.totalorder %s13, 3
      %p112 = pnand %p110, %p111
      %p113 = pneg %p112
      // Predicated region
      $region9: #{tpu_custom_call.1} parent=5 // pred_check
        _
      $region10: #{tpu_custom_call.1} parent=5 // pred_check_branch
        %115 = sbr.rel (%p112) target = $region12
      $region11: #{tpu_custom_call.1} parent=5 // pred_region
        %s116 = ssub.s32 %s13, 1
        // Predicated region
        $region13: #{tpu_custom_call.1} parent=11 // pred_check
          %p117 = pneg %p34
        $region14: #{tpu_custom_call.1} parent=11 // pred_check_branch
          %119 = sbr.rel (%p117) target = $region16
        $region15: #{tpu_custom_call.1} parent=11 // pred_region
          %s121 = ssub.s32 288, 288
          %122 = vsyncadd [#allocation3], %s121
          %s124 = sshll.u32 [#allocation2], 4
          %s125 = int_to_ptr.vmem [resolvable:$true] %s124
          %127 = dma.hbm_to_vmem [thread:$0]  %s0, 288, %s125, [#allocation3]
        $region16: #{tpu_custom_call.1} parent=11 // pred_fallthru
          _
        // Predicated region
        $region17: #{tpu_custom_call.1} parent=11 // pred_check
          %p128 = pneg %p55
        $region18: #{tpu_custom_call.1} parent=11 // pred_check_branch
          %130 = sbr.rel (%p128) target = $region20
        $region19: #{tpu_custom_call.1} parent=11 // pred_region
          _
        $region20: #{tpu_custom_call.1} parent=11 // pred_fallthru
          _
        // Predicated region
        $region21: #{tpu_custom_call.1} parent=11 // pred_check
          %p131 = pneg %p76
        $region22: #{tpu_custom_call.1} parent=11 // pred_check_branch
          %133 = sbr.rel (%p131) target = $region24
        $region23: #{tpu_custom_call.1} parent=11 // pred_region
          _
        $region24: #{tpu_custom_call.1} parent=11 // pred_fallthru
          _
      $region12: #{tpu_custom_call.1} parent=5 // pred_fallthru
        _
      %p134 = scmp.lt.s32.totalorder %s13, 2
      // Predicated region
      $region25: #{tpu_custom_call.1} parent=5 // pred_check
        %p135 = pneg %p134
      $region26: #{tpu_custom_call.1} parent=5 // pred_check_branch
        %137 = sbr.rel (%p135) target = $region28
      $region27: #{tpu_custom_call.1} parent=5 // pred_region
        _
      $region28: #{tpu_custom_call.1} parent=5 // pred_fallthru
        _
      %p138 = scmp.le.s32.totalorder 1, %s13
      %p139 = scmp.lt.s32.totalorder %s13, 3
      %p140 = pnand %p138, %p139
      %p141 = pneg %p140
      // Predicated region
      $region29: #{tpu_custom_call.1} parent=5 // pred_check
        _
      $region30: #{tpu_custom_call.1} parent=5 // pred_check_branch
        %143 = sbr.rel (%p140) target = $region32
      $region31: #{tpu_custom_call.1} parent=5 // pred_region
        %s144 = ssub.s32 %s13, 1
        // Predicated region
        $region33: #{tpu_custom_call.1} parent=31 // pred_check
          %p145 = pneg %p34
        $region34: #{tpu_custom_call.1} parent=31 // pred_check_branch
          %147 = sbr.rel (%p145) target = $region36
        $region35: #{tpu_custom_call.1} parent=31 // pred_region
          %148 = dma.done [#allocation3], 288
        $region36: #{tpu_custom_call.1} parent=31 // pred_fallthru
          _
        %p149 = pneg %p34
        %p150 = pneg %p31
        %p151 = pneg %p55
        %p152 = pneg %p52
        %p153 = pneg %p76
        %p154 = pneg %p73
        %p155 = pneg %p102
        %p156 = pneg %p99
        %s157 = sand.u32 %s89, 1
        %s158 = scalar_lea.sflag [#allocation4], %s157
        %s159 = sand.u32 %s89, 1
        %s160 = smul.addr %s159, 16
        %s161 = scalar_lea.vmem [#allocation5], %s160
        %s162 = smul.u32 4, %s18
        %s164 = smul.u32 %s18, 512
        %s165 = sshra.s32 %s164, 7
        %s166 = sand.u32 %s164, 127
        %s167 = smul.addr %s165, 2
        %s168 = scalar_lea.vmem [#allocation2], %s167
        %v169 = vld [vmem:[%s168] sm:$0xff]
        %v170 = vld [vmem:[%s168 + $0x8] sm:$0x3]
        %v172 = vcombine.high %v169, %v169
        %v174 = vunpack.c.l.s4 1983009808
        %v175 = vunpack.c.0.s8 %v174
        %v176 = vlaneseq
        %v177 = vshrl.u32 %v176, 7
        %v178 = vsub.s32 %v175, %v177
        %v179 = vrot.slane %v169, %v178
        %v181 = vunpack.c.l.s4 1983009808
        %v182 = vunpack.c.0.s8 %v181
        %v183 = vlaneseq
        %v184 = vshrl.u32 %v183, 7
        %v185 = vsub.s32 %v182, %v184
        %v186 = vrot.slane %v172, %v185
        %v187 = vcombine.high %v179, %v179
        %v188 = vcombine.high %v186, %v186
        %v190 = vcombine.low %v169, %v169
        %v192 = vunpack.c.l.s4 1983009808
        %v193 = vunpack.c.0.s8 %v192
        %v194 = vlaneseq
        %v195 = vshrl.u32 %v194, 7
        %v196 = vsub.s32 %v193, %v195
        %v197 = vrot.slane %v190, %v196
        %v198 = vcombine.high %v197, %v197
        %v199 = vcombine.low %v170, %v170
        %v201 = vunpack.c.l.s4 1983009808
        %v202 = vunpack.c.0.s8 %v201
        %v203 = vlaneseq
        %v204 = vshrl.u32 %v203, 7
        %v205 = vsub.s32 %v202, %v204
        %v206 = vrot.slane %v199, %v205
        %v208 = vunpack.c.l.s4 1983009808
        %v209 = vunpack.c.0.s8 %v208
        %v210 = vlaneseq
        %v211 = vshrl.u32 %v210, 7
        %v212 = vsub.s32 %v209, %v211
        %v213 = vrot.slane %v170, %v212
        %214 = vrot.lane.b32.xlu0 %v197, 127
        %v215 = vpop.permute.xlu0 %214
        %216 = vrot.lane.b32.xlu0 %v198, 127
        %v217 = vpop.permute.xlu0 %216
        %218 = vrot.lane.b32.xlu0 %v179, 127
        %v219 = vpop.permute.xlu0 %218
        %220 = vrot.lane.b32.xlu0 %v187, 127
        %v221 = vpop.permute.xlu0 %220
        %222 = vrot.lane.b32.xlu0 %v206, 127
        %v223 = vpop.permute.xlu0 %222
        %vm224 = vcmask 1039360
        %v225 = vsel %vm224, %v215, %v217
        %v226 = vsel %vm224, %v217, %v219
        %v227 = vsel %vm224, %v219, %v221
        %v228 = vsel %vm224, %v221, %v223
        %v229 = vcombine.low %v179, %v179
        %v230 = vcombine.low %v186, %v186
        %v231 = vcombine.low %v213, %v213
        %232 = vrot.lane.b32.xlu0 %v229, 126
        %v233 = vpop.permute.xlu0 %232
        %234 = vrot.lane.b32.xlu0 %v179, 126
        %v235 = vpop.permute.xlu0 %234
        %236 = vrot.lane.b32.xlu0 %v230, 126
        %v237 = vpop.permute.xlu0 %236
        %238 = vrot.lane.b32.xlu0 %v186, 126
        %v239 = vpop.permute.xlu0 %238
        %240 = vrot.lane.b32.xlu0 %v231, 126
        %v241 = vpop.permute.xlu0 %240
        %vm242 = vcmask 1031168
        %v243 = vsel %vm242, %v233, %v235
        %v244 = vsel %vm242, %v235, %v237
        %v245 = vsel %vm242, %v237, %v239
        %v246 = vsel %vm242, %v239, %v241
        %vm247 = vcmask 1041408
        %v250 = vsel %vm247, %v179, %v225
        %v253 = vsel %vm247, %v187, %v226
        %v256 = vsel %vm247, %v186, %v227
        %v259 = vsel %vm247, %v188, %v228
        %vm260 = vcmask 1043456
        %v262 = vsel %vm260, %v250, %v243
        %v264 = vsel %vm260, %v253, %v244
        %v266 = vsel %vm260, %v256, %v245
        %v268 = vsel %vm260, %v259, %v246
        %v269 = vld [vmem:[%s1] sm:$0x3]
        %v272 = vsel %vm247, %v213, %v223
        %v274 = vsel %vm260, %v272, %v241
        %s275 = scalar_lea.vmem %s1, 2
        %v276 = vld [vmem:[%s275] sm:$0x3]
        %282 = vrot.lane.b32.xlu0 %v262, 110
        %v283 = vpop.permute.xlu0 %282
        %284 = vrot.lane.b32.xlu0 %v264, 110
        %v285 = vpop.permute.xlu0 %284
        %286 = vrot.lane.b32.xlu0 %v266, 110
        %v287 = vpop.permute.xlu0 %286
        %288 = vrot.lane.b32.xlu0 %v268, 110
        %v289 = vpop.permute.xlu0 %288
        %290 = vrot.lane.b32.xlu0 %v274, 110
        %v291 = vpop.permute.xlu0 %290
        %vm292 = vcmask 900096
        %v293 = vsel %vm292, %v283, %v285
        %v294 = vsel %vm292, %v285, %v287
        %v295 = vsel %vm292, %v287, %v289
        %v296 = vsel %vm292, %v289, %v291
        %vm297 = vcmask 97280
        %v299 = vsel %vm297, %v276, 0
        %vm301 = vcmask 1045504
        %v303 = vsel %vm301, %v293, 0
        %v306 = vsel %vm301, %v294, 0
        %v309 = vsel %vm301, %v295, 0
        %v312 = vsel %vm301, %v296, 0
        %314 = vmatprep.subr.bf16.mxu0 %v306
        %315 = vmatpush1.bf16.msra.mxu0 %v303
        %316 = vmatprep.subr.bf16.mxu0 0
        %317 = vmatpush1.bf16.msra.mxu0 0
        %318 = vmatprep.subr.bf16.mxu0 0
        %319 = vmatpush1.bf16.msra.mxu0 0
        %320 = vmatprep.subr.bf16.mxu0 0
        %321 = vmatpush1.bf16.msra.mxu0 0
        %322 = vmatprep.subr.bf16.mxu0 0
        %323 = vmatpush1.bf16.msra.mxu0 0
        %324 = vmatprep.subr.bf16.mxu0 0
        %325 = vmatpush1.bf16.msra.mxu0 0
        %326 = vmatprep.subr.bf16.mxu0 0
        %327 = vmatpush1.bf16.msra.mxu0 0
        %328 = vmatprep.subr.bf16.mxu0 0
        %329 = vmatpush1.bf16.msra.mxu0 0
        %330 = vmatprep.subr.bf16.mxu0 0
        %331 = vmatpush1.bf16.msra.mxu0 0
        %332 = vmatprep.subr.bf16.mxu0 0
        %333 = vmatpush1.bf16.msra.mxu0 0
        %334 = vmatprep.subr.bf16.mxu0 0
        %335 = vmatpush1.bf16.msra.mxu0 0
        %336 = vmatprep.subr.bf16.mxu0 0
        %337 = vmatpush1.bf16.msra.mxu0 0
        %338 = vmatprep.subr.bf16.mxu0 0
        %339 = vmatpush1.bf16.msra.mxu0 0
        %340 = vmatprep.subr.bf16.mxu0 0
        %341 = vmatpush1.bf16.msra.mxu0 0
        %342 = vmatprep.subr.bf16.mxu0 0
        %343 = vmatpush1.bf16.msra.mxu0 0
        %344 = vmatprep.subr.bf16.mxu0 0
        %345 = vmatpush1.bf16.msra.mxu0 0
        %346 = vmatprep.mubr.bf16.mxu0 0
        %347 = vmatmul.mubr.bf16.gmra.mrb[0].mxu0 %v299
        %v348 = vpop.f32.mrb[0].mxu0
        %v349 = vadd.f32 0.0, %v348
        %v350 = vpop.f32.mrb[0].mxu0
        %v351 = vadd.f32 0.0, %v350
        %v352 = vpop.f32.mrb[0].mxu0
        %v353 = vpop.f32.mrb[0].mxu0
        %354 = vdwg.mxu0
        %355 = vmatprep.subr.bf16.mxu0 %v312
        %356 = vmatpush1.bf16.msra.mxu0 %v309
        %357 = vmatprep.subr.bf16.mxu0 0
        %358 = vmatpush1.bf16.msra.mxu0 0
        %359 = vmatprep.subr.bf16.mxu0 0
        %360 = vmatpush1.bf16.msra.mxu0 0
        %361 = vmatprep.subr.bf16.mxu0 0
        %362 = vmatpush1.bf16.msra.mxu0 0
        %363 = vmatprep.subr.bf16.mxu0 0
        %364 = vmatpush1.bf16.msra.mxu0 0
        %365 = vmatprep.subr.bf16.mxu0 0
        %366 = vmatpush1.bf16.msra.mxu0 0
        %367 = vmatprep.subr.bf16.mxu0 0
        %368 = vmatpush1.bf16.msra.mxu0 0
        %369 = vmatprep.subr.bf16.mxu0 0
        %370 = vmatpush1.bf16.msra.mxu0 0
        %371 = vmatprep.subr.bf16.mxu0 0
        %372 = vmatpush1.bf16.msra.mxu0 0
        %373 = vmatprep.subr.bf16.mxu0 0
        %374 = vmatpush1.bf16.msra.mxu0 0
        %375 = vmatprep.subr.bf16.mxu0 0
        %376 = vmatpush1.bf16.msra.mxu0 0
        %377 = vmatprep.subr.bf16.mxu0 0
        %378 = vmatpush1.bf16.msra.mxu0 0
        %379 = vmatprep.subr.bf16.mxu0 0
        %380 = vmatpush1.bf16.msra.mxu0 0
        %381 = vmatprep.subr.bf16.mxu0 0
        %382 = vmatpush1.bf16.msra.mxu0 0
        %383 = vmatprep.subr.bf16.mxu0 0
        %384 = vmatpush1.bf16.msra.mxu0 0
        %385 = vmatprep.subr.bf16.mxu0 0
        %386 = vmatpush1.bf16.msra.mxu0 0
        %387 = vmatprep.mubr.bf16.mxu0 0
        %388 = vmatmul.mubr.bf16.gmra.mrb[0].mxu0 %v299
        %v389 = vpop.f32.mrb[0].mxu0
        %v390 = vadd.f32 0.0, %v389
        %v391 = vpop.f32.mrb[0].mxu0
        %v392 = vadd.f32 0.0, %v391
        %v393 = vpop.f32.mrb[0].mxu0
        %v394 = vpop.f32.mrb[0].mxu0
        %395 = vdwg.mxu0
        %v397 = vsel %vm297, %v269, 0
        %v399 = vsel %vm301, %v262, 0
        %v401 = vsel %vm301, %v264, 0
        %v403 = vsel %vm301, %v266, 0
        %v405 = vsel %vm301, %v268, 0
        %407 = vmatprep.subr.bf16.mxu0 %v401
        %408 = vmatpush1.bf16.msra.mxu0 %v399
        %409 = vmatprep.subr.bf16.mxu0 0
        %410 = vmatpush1.bf16.msra.mxu0 0
        %411 = vmatprep.subr.bf16.mxu0 0
        %412 = vmatpush1.bf16.msra.mxu0 0
        %413 = vmatprep.subr.bf16.mxu0 0
        %414 = vmatpush1.bf16.msra.mxu0 0
        %415 = vmatprep.subr.bf16.mxu0 0
        %416 = vmatpush1.bf16.msra.mxu0 0
        %417 = vmatprep.subr.bf16.mxu0 0
        %418 = vmatpush1.bf16.msra.mxu0 0
        %419 = vmatprep.subr.bf16.mxu0 0
        %420 = vmatpush1.bf16.msra.mxu0 0
        %421 = vmatprep.subr.bf16.mxu0 0
        %422 = vmatpush1.bf16.msra.mxu0 0
        %423 = vmatprep.subr.bf16.mxu0 0
        %424 = vmatpush1.bf16.msra.mxu0 0
        %425 = vmatprep.subr.bf16.mxu0 0
        %426 = vmatpush1.bf16.msra.mxu0 0
        %427 = vmatprep.subr.bf16.mxu0 0
        %428 = vmatpush1.bf16.msra.mxu0 0
        %429 = vmatprep.subr.bf16.mxu0 0
        %430 = vmatpush1.bf16.msra.mxu0 0
        %431 = vmatprep.subr.bf16.mxu0 0
        %432 = vmatpush1.bf16.msra.mxu0 0
        %433 = vmatprep.subr.bf16.mxu0 0
        %434 = vmatpush1.bf16.msra.mxu0 0
        %435 = vmatprep.subr.bf16.mxu0 0
        %436 = vmatpush1.bf16.msra.mxu0 0
        %437 = vmatprep.subr.bf16.mxu0 0
        %438 = vmatpush1.bf16.msra.mxu0 0
        %439 = vmatprep.mubr.bf16.mxu0 0
        %440 = vmatmul.mubr.bf16.gmra.mrb[0].mxu0 %v397
        %v441 = vpop.f32.mrb[0].mxu0
        %v442 = vadd.f32 %v349, %v441
        %v443 = vpop.f32.mrb[0].mxu0
        %v444 = vadd.f32 %v351, %v443
        %v445 = vpop.f32.mrb[0].mxu0
        %v446 = vpop.f32.mrb[0].mxu0
        %447 = vdwg.mxu0
        %448 = vmatprep.subr.bf16.mxu0 %v405
        %449 = vmatpush1.bf16.msra.mxu0 %v403
        %450 = vmatprep.subr.bf16.mxu0 0
        %451 = vmatpush1.bf16.msra.mxu0 0
        %452 = vmatprep.subr.bf16.mxu0 0
        %453 = vmatpush1.bf16.msra.mxu0 0
        %454 = vmatprep.subr.bf16.mxu0 0
        %455 = vmatpush1.bf16.msra.mxu0 0
        %456 = vmatprep.subr.bf16.mxu0 0
        %457 = vmatpush1.bf16.msra.mxu0 0
        %458 = vmatprep.subr.bf16.mxu0 0
        %459 = vmatpush1.bf16.msra.mxu0 0
        %460 = vmatprep.subr.bf16.mxu0 0
        %461 = vmatpush1.bf16.msra.mxu0 0
        %462 = vmatprep.subr.bf16.mxu0 0
        %463 = vmatpush1.bf16.msra.mxu0 0
        %464 = vmatprep.subr.bf16.mxu0 0
        %465 = vmatpush1.bf16.msra.mxu0 0
        %466 = vmatprep.subr.bf16.mxu0 0
        %467 = vmatpush1.bf16.msra.mxu0 0
        %468 = vmatprep.subr.bf16.mxu0 0
        %469 = vmatpush1.bf16.msra.mxu0 0
        %470 = vmatprep.subr.bf16.mxu0 0
        %471 = vmatpush1.bf16.msra.mxu0 0
        %472 = vmatprep.subr.bf16.mxu0 0
        %473 = vmatpush1.bf16.msra.mxu0 0
        %474 = vmatprep.subr.bf16.mxu0 0
        %475 = vmatpush1.bf16.msra.mxu0 0
        %476 = vmatprep.subr.bf16.mxu0 0
        %477 = vmatpush1.bf16.msra.mxu0 0
        %478 = vmatprep.subr.bf16.mxu0 0
        %479 = vmatpush1.bf16.msra.mxu0 0
        %480 = vmatprep.mubr.bf16.mxu0 0
        %481 = vmatmul.mubr.bf16.gmra.mrb[0].mxu0 %v397
        %v482 = vpop.f32.mrb[0].mxu0
        %v483 = vadd.f32 %v390, %v482
        %v484 = vpop.f32.mrb[0].mxu0
        %v485 = vadd.f32 %v392, %v484
        %v486 = vpop.f32.mrb[0].mxu0
        %v487 = vpop.f32.mrb[0].mxu0
        %488 = vdwg.mxu0
        %s489 = scalar_lea.vmem %s1, 4
        %v490 = vld [vmem:[%s489] sm:$0x3]
        %491 = vrot.lane.b32.xlu0 %v262, 92
        %v492 = vpop.permute.xlu0 %491
        %493 = vrot.lane.b32.xlu0 %v264, 92
        %v494 = vpop.permute.xlu0 %493
        %495 = vrot.lane.b32.xlu0 %v266, 92
        %v496 = vpop.permute.xlu0 %495
        %497 = vrot.lane.b32.xlu0 %v268, 92
        %v498 = vpop.permute.xlu0 %497
        %499 = vrot.lane.b32.xlu0 %v274, 92
        %v500 = vpop.permute.xlu0 %499
        %vm501 = vcmask 752640
        %v502 = vsel %vm501, %v492, %v494
        %v503 = vsel %vm501, %v494, %v496
        %v504 = vsel %vm501, %v496, %v498
        %v505 = vsel %vm501, %v498, %v500
        %v507 = vsel %vm297, %v490, 0
        %v510 = vsel %vm301, %v502, 0
        %v513 = vsel %vm301, %v503, 0
        %v516 = vsel %vm301, %v504, 0
        %v519 = vsel %vm301, %v505, 0
        %521 = vmatprep.subr.bf16.mxu0 %v513
        %522 = vmatpush1.bf16.msra.mxu0 %v510
        %523 = vmatprep.subr.bf16.mxu0 0
        %524 = vmatpush1.bf16.msra.mxu0 0
        %525 = vmatprep.subr.bf16.mxu0 0
        %526 = vmatpush1.bf16.msra.mxu0 0
        %527 = vmatprep.subr.bf16.mxu0 0
        %528 = vmatpush1.bf16.msra.mxu0 0
        %529 = vmatprep.subr.bf16.mxu0 0
        %530 = vmatpush1.bf16.msra.mxu0 0
        %531 = vmatprep.subr.bf16.mxu0 0
        %532 = vmatpush1.bf16.msra.mxu0 0
        %533 = vmatprep.subr.bf16.mxu0 0
        %534 = vmatpush1.bf16.msra.mxu0 0
        %535 = vmatprep.subr.bf16.mxu0 0
        %536 = vmatpush1.bf16.msra.mxu0 0
        %537 = vmatprep.subr.bf16.mxu0 0
        %538 = vmatpush1.bf16.msra.mxu0 0
        %539 = vmatprep.subr.bf16.mxu0 0
        %540 = vmatpush1.bf16.msra.mxu0 0
        %541 = vmatprep.subr.bf16.mxu0 0
        %542 = vmatpush1.bf16.msra.mxu0 0
        %543 = vmatprep.subr.bf16.mxu0 0
        %544 = vmatpush1.bf16.msra.mxu0 0
        %545 = vmatprep.subr.bf16.mxu0 0
        %546 = vmatpush1.bf16.msra.mxu0 0
        %547 = vmatprep.subr.bf16.mxu0 0
        %548 = vmatpush1.bf16.msra.mxu0 0
        %549 = vmatprep.subr.bf16.mxu0 0
        %550 = vmatpush1.bf16.msra.mxu0 0
        %551 = vmatprep.subr.bf16.mxu0 0
        %552 = vmatpush1.bf16.msra.mxu0 0
        %553 = vmatprep.mubr.bf16.mxu0 0
        %554 = vmatmul.mubr.bf16.gmra.mrb[0].mxu0 %v507
        %v555 = vpop.f32.mrb[0].mxu0
        %v556 = vadd.f32 0.0, %v555
        %v557 = vpop.f32.mrb[0].mxu0
        %v558 = vadd.f32 0.0, %v557
        %v559 = vpop.f32.mrb[0].mxu0
        %v560 = vpop.f32.mrb[0].mxu0
        %561 = vdwg.mxu0
        %562 = vmatprep.subr.bf16.mxu0 %v519
        %563 = vmatpush1.bf16.msra.mxu0 %v516
        %564 = vmatprep.subr.bf16.mxu0 0
        %565 = vmatpush1.bf16.msra.mxu0 0
        %566 = vmatprep.subr.bf16.mxu0 0
        %567 = vmatpush1.bf16.msra.mxu0 0
        %568 = vmatprep.subr.bf16.mxu0 0
        %569 = vmatpush1.bf16.msra.mxu0 0
        %570 = vmatprep.subr.bf16.mxu0 0
        %571 = vmatpush1.bf16.msra.mxu0 0
        %572 = vmatprep.subr.bf16.mxu0 0
        %573 = vmatpush1.bf16.msra.mxu0 0
        %574 = vmatprep.subr.bf16.mxu0 0
        %575 = vmatpush1.bf16.msra.mxu0 0
        %576 = vmatprep.subr.bf16.mxu0 0
        %577 = vmatpush1.bf16.msra.mxu0 0
        %578 = vmatprep.subr.bf16.mxu0 0
        %579 = vmatpush1.bf16.msra.mxu0 0
        %580 = vmatprep.subr.bf16.mxu0 0
        %581 = vmatpush1.bf16.msra.mxu0 0
        %582 = vmatprep.subr.bf16.mxu0 0
        %583 = vmatpush1.bf16.msra.mxu0 0
        %584 = vmatprep.subr.bf16.mxu0 0
        %585 = vmatpush1.bf16.msra.mxu0 0
        %586 = vmatprep.subr.bf16.mxu0 0
        %587 = vmatpush1.bf16.msra.mxu0 0
        %588 = vmatprep.subr.bf16.mxu0 0
        %589 = vmatpush1.bf16.msra.mxu0 0
        %590 = vmatprep.subr.bf16.mxu0 0
        %591 = vmatpush1.bf16.msra.mxu0 0
        %592 = vmatprep.subr.bf16.mxu0 0
        %593 = vmatpush1.bf16.msra.mxu0 0
        %594 = vmatprep.mubr.bf16.mxu0 0
        %595 = vmatmul.mubr.bf16.gmra.mrb[0].mxu0 %v507
        %v596 = vpop.f32.mrb[0].mxu0
        %v597 = vadd.f32 0.0, %v596
        %v598 = vpop.f32.mrb[0].mxu0
        %v599 = vadd.f32 0.0, %v598
        %v600 = vpop.f32.mrb[0].mxu0
        %v601 = vpop.f32.mrb[0].mxu0
        %602 = vdwg.mxu0
        %v603 = vadd.f32 %v442, %v556
        %v604 = vadd.f32 %v444, %v558
        %v605 = vadd.f32 %v483, %v597
        %v606 = vadd.f32 %v485, %v599
        %v607 = vld [vmem:[%s2] sm:$0xf]
        %609 = vset.pattern.permute.xlu0 0
        %610 = vperm.xlu0 %609, %v607
        %v611 = vpop.permute.xlu0 %610
        %v613 = vadd.f32 %v603, %v611
        %v614 = vadd.f32 %v604, %v611
        %v615 = vadd.f32 %v605, %v611
        %v616 = vadd.f32 %v606, %v611
        %v617 = vunpack.c.l.bf16 %v169
        %v618 = vunpack.c.h.bf16 %v169
        %v619 = vunpack.c.l.bf16 %v170
        %v623 = vcombine.high %v617, %v617
        %v624 = vcombine.high %v618, %v618
        %625 = vrot.lane.b32.xlu0 %v617, 109
        %v626 = vpop.permute.xlu0 %625
        %627 = vrot.lane.b32.xlu0 %v623, 109
        %v628 = vpop.permute.xlu0 %627
        %629 = vrot.lane.b32.xlu0 %v618, 109
        %v630 = vpop.permute.xlu0 %629
        %631 = vrot.lane.b32.xlu0 %v624, 109
        %v632 = vpop.permute.xlu0 %631
        %633 = vrot.lane.b32.xlu0 %v619, 109
        %v634 = vpop.permute.xlu0 %633
        %vm635 = vcmask 891904
        %v636 = vsel %vm635, %v626, %v628
        %v637 = vsel %vm635, %v628, %v630
        %v638 = vsel %vm635, %v630, %v632
        %v639 = vsel %vm635, %v632, %v634
        %v644 = vadd.f32 %v613, %v636
        %v645 = vadd.f32 %v614, %v637
        %v646 = vadd.f32 %v615, %v638
        %v647 = vadd.f32 %v616, %v639
        %v652 = vcombine.low %v644, %v645
        %v653 = vcombine.low %v646, %v647
        %656 = vst [vmem:[%s161] sm:$0xff] %v652
        %657 = vst [vmem:[%s161 + $0x8] sm:$0xff] %v653
        %s658 = sand.u32 %s89, 1
        %s659 = scalar_lea.sflag [#allocation4], %s658
        %s660 = sand.u32 %s89, 1
        %s661 = smul.addr %s660, 16
        %s662 = scalar_lea.vmem [#allocation5], %s661
        // Predicated region
        $region37: #{tpu_custom_call.1} parent=31 // pred_check
          %p663 = pneg %p99
        $region38: #{tpu_custom_call.1} parent=31 // pred_check_branch
          %665 = sbr.rel (%p663) target = $region40
        $region39: #{tpu_custom_call.1} parent=31 // pred_region
          %s666 = smul.u32 4, %s18
          %s668 = ssub.s32 256, 256
          %669 = vsyncadd %s659, %s668
          %s670 = smul.addr %s666, 64
          %s671 = scalar_lea.hbm %s3, %s670
          %s673 = sshll.u32 %s662, 4
          %s674 = int_to_ptr.vmem [resolvable:$true] %s673
          %676 = dma.vmem_to_hbm [thread:$0]  %s674, 256, %s671, %s659
        $region40: #{tpu_custom_call.1} parent=31 // pred_fallthru
          _
      $region32: #{tpu_custom_call.1} parent=5 // pred_fallthru
        _
      %p677 = scmp.le.s32.totalorder 2, %s13
      // Predicated region
      $region41: #{tpu_custom_call.1} parent=5 // pred_check
        %p678 = pneg %p677
      $region42: #{tpu_custom_call.1} parent=5 // pred_check_branch
        %680 = sbr.rel (%p678) target = $region44
      $region43: #{tpu_custom_call.1} parent=5 // pred_region
        %s681 = ssub.s32 %s13, 2
        // Predicated region
        $region45: #{tpu_custom_call.1} parent=43 // pred_check
          %p682 = pneg %p105
        $region46: #{tpu_custom_call.1} parent=43 // pred_check_branch
          %684 = sbr.rel (%p682) target = $region48
        $region47: #{tpu_custom_call.1} parent=43 // pred_region
          %s685 = sand.u32 %s90, 1
          %s686 = scalar_lea.sflag [#allocation4], %s685
          %s687 = sand.u32 %s90, 1
          %s688 = smul.addr %s687, 16
          %s689 = scalar_lea.vmem [#allocation5], %s688
          %690 = dma.done %s686, 256
        $region48: #{tpu_custom_call.1} parent=43 // pred_fallthru
          _
      $region44: #{tpu_custom_call.1} parent=5 // pred_fallthru
        _
    $region6: #{tpu_custom_call.1} parent=1 // loop_footer
      %s17 = sadd.s32 1, %s13
    $region7: #{tpu_custom_call.1} parent=1 // loop_footer_branch
      %12 = sbr.rel target = $region3
    $region8: #{tpu_custom_call.1} parent=1 // loop_exit
      _
    %691 = vsyncpa [#allocation3], 1
    %s692 = scalar_lea.sflag [#allocation3], 1
    %693 = vsyncpa %s692, 1
    %694 = vsyncpa [#allocation4], 1
    %s695 = scalar_lea.sflag [#allocation4], 1
    %696 = vsyncpa %s695, 1

</llo_original>
